<compile_context>
chip_gen: v6e
topology: v6e:2x2x1
jax: 0.10.0
libtpu: 0.0.40
codegen_flags: <defaults>
</compile_context>

<pallas_src>
import functools

import jax
import jax.numpy as jnp
from jax.experimental import pallas as pl
from jax.experimental.pallas import tpu as pltpu


def _round_up(v, m):
    return (v + m - 1) // m * m


def _fold_kernel(xx_ref, x_ref, o_ref, *, k, h, w, hw_pad):
    """One batch-tile of Fold.

    xx_ref : (1,  hw_pad)        int32 column index, xx[p] = p % w (from wrapper)
    x_ref  : (TB, k*k * hw_pad)  input tile, channels contiguous on the lane axis
    o_ref  : (TB, hw_pad)        output tile (lane-dense, unmasked stores)
    """
    tb = x_ref.shape[0]
    pad = k // 2

    # Hoisted, computed once: flat position and column index of every output lane.
    pos = jax.lax.broadcasted_iota(jnp.int32, (tb, hw_pad), 1)
    xx = jnp.broadcast_to(xx_ref[...], (tb, hw_pad))

    # Row validity of a dy shift can be tested on the flat index alone:
    #   floor(p / w) + dy in [0, h)  <=>  -dy*w <= p < (h - dy) * w
    valid_row = {dy: (pos >= -dy * w) & (pos < (h - dy) * w)
                 for dy in range(-pad, pad + 1) if dy != 0}
    valid_col = {dx: (xx + dx >= 0) & (xx + dx < w)
                 for dx in range(-pad, pad + 1) if dx != 0}

    acc = jnp.zeros((tb, hw_pad), jnp.float32)
    for j in range(k):                          # static unroll: k*k shifted adds
        dx = pad - j
        part = None
        for i in range(k):
            dy = pad - i
            c = i * k + j
            off = dy * w + dx                   # flat shift: out[p] reads in[p + off]
            ch = x_ref[:, c * hw_pad:(c + 1) * hw_pad]
            if off != 0:
                # Cyclic lane rotation on the (otherwise idle) XLU.  Any read
                # that wraps or lands in the wrong row/column is masked below.
                ch = pltpu.roll(ch, shift=(-off) % hw_pad, axis=1)
            ch = ch.astype(jnp.float32)
            if dy != 0:
                ch = jnp.where(valid_row[dy], ch, 0.0)
            part = ch if part is None else part + ch
        if dx != 0:                             # shared column mask, once per dx
            part = jnp.where(valid_col[dx], part, 0.0)
        acc = acc + part

    o_ref[...] = acc.astype(o_ref.dtype)


def fold(x, kernel_size=3):
    """Pallas equivalent of Fold(kernel_size).forward(x) for odd kernel_size."""
    b, c, h, w = x.shape
    k = kernel_size
    assert k % 2 == 1, "Fold requires odd kernel_size (pad = k // 2)"
    assert c == k * k, f"expected {k * k} channels, got {c}"
    hw = h * w
    hw_pad = _round_up(hw, 128)                # lane-dense blocks / unmasked stores
    itemsize = jnp.dtype(x.dtype).itemsize

    # Lane-dense 2D layouts: (b, c*hw_pad) input, (b, hw_pad) output.
    x_flat = x.reshape(b, c, hw)
    if hw_pad != hw:
        x_flat = jnp.pad(x_flat, ((0, 0), (0, 0), (0, hw_pad - hw)))
    x_flat = x_flat.reshape(b, c * hw_pad)
    xx = (jnp.arange(hw_pad, dtype=jnp.int32) % w).reshape(1, hw_pad)

    # ---- generation-aware batch tiling (TB batch rows per grid step) ----
    try:
        vmem_cap = int(pltpu.get_tpu_info().vmem_capacity_bytes)
    except Exception:                          # conservative fallback (v7x per-TC)
        vmem_cap = 64 * 1024 * 1024
    vmem_budget = (vmem_cap * 3) // 4
    vmem_limit = int(min(vmem_cap, vmem_budget + vmem_cap // 8))

    in_b = c * hw_pad * itemsize               # one input row (already lane-padded)
    out_b = hw_pad * itemsize
    work_b = 12 * hw_pad * 4                   # f32 accumulator / masks / roll temps
    vmem_per_b = 2 * in_b + 2 * out_b + work_b  # double-buffered blocks + working set

    tb = min(b, max(1, vmem_budget // vmem_per_b))
    if tb == b and b >= 16:
        tb = pl.cdiv(b, 2)                     # >= 2 steps: feed both v7x TensorCores
    if tb < b:
        tb = min(b, max(8, (tb // 8) * 8))     # keep the block's sublane dim 8-aligned
    # TODO(synk): if a single batch row ever exceeded the VMEM budget (enormous
    # H*W) the next step would be spatial tiling with halo index maps; the module
    # calls fold on the coarse (hh, ww) super-token grid, so batch tiling suffices.

    grid = (pl.cdiv(b, tb),)                   # partial trailing block handled by Pallas

    kernel = functools.partial(_fold_kernel, k=k, h=h, w=w, hw_pad=hw_pad)
    out_flat = pl.pallas_call(
        kernel,
        out_shape=jax.ShapeDtypeStruct((b, hw_pad), x.dtype),
        grid=grid,
        in_specs=[
            pl.BlockSpec((1, hw_pad), lambda n: (0, 0)),        # column indices
            pl.BlockSpec((tb, c * hw_pad), lambda n: (n, 0)),   # input batch tile
        ],
        out_specs=pl.BlockSpec((tb, hw_pad), lambda n: (n, 0)),
        compiler_params=pltpu.CompilerParams(
            dimension_semantics=("parallel",),                  # megacore sharding
            vmem_limit_bytes=vmem_limit),
    )(xx, x_flat)
    return out_flat[:, :hw].reshape(b, 1, h, w)


def _fold_reference(x, kernel_size=3):
    """Independent jnp reference following the conv_transpose2d formula directly."""
    b, c, h, w = x.shape
    k = kernel_size
    pad = k // 2
    out = jnp.zeros((b, 1, h, w), jnp.float32)
    for i in range(k):
        for j in range(k):
            ch = x[:, i * k + j].astype(jnp.float32)  # (b, h, w)
            dy, dx = pad - i, pad - j
            oy0, oy1 = max(0, -dy), min(h, h - dy)
            ox0, ox1 = max(0, -dx), min(w, w - dx)
            out = out.at[:, 0, oy0:oy1, ox0:ox1].add(
                ch[:, oy0 + dy:oy1 + dy, ox0 + dx:ox1 + dx])
    return out.astype(x.dtype)


if __name__ == "__main__":
    key = jax.random.PRNGKey(0)
    k = 3

    # Case 1: hw is already a multiple of 128 (16*16 = 256).
    B, H, W = 2, 16, 16
    x = jax.random.normal(key, (B, k * k, H, W), dtype=jnp.float32)
    y = jax.block_until_ready(fold(x, kernel_size=k))
    y_ref = _fold_reference(x, kernel_size=k)
    assert y.shape == (B, 1, H, W), y.shape
    assert jnp.allclose(y, y_ref, atol=1e-5, rtol=1e-5), "mismatch vs reference (16x16)"

    # Case 2: hw not a multiple of 128 (10*10 = 100) and odd batch -> exercises the
    # lane-padding path and the roll/mask handling at the padded tail.
    key2 = jax.random.fold_in(key, 1)
    B2, H2, W2 = 3, 10, 10
    x2 = jax.random.normal(key2, (B2, k * k, H2, W2), dtype=jnp.float32)
    y2 = jax.block_until_ready(fold(x2, kernel_size=k))
    y2_ref = _fold_reference(x2, kernel_size=k)
    assert y2.shape == (B2, 1, H2, W2), y2.shape
    assert jnp.allclose(y2, y2_ref, atol=1e-5, rtol=1e-5), "mismatch vs reference (10x10)"

    print("KERNEL_OK")
</pallas_src>

<mosaic_0001>
module attributes {stable_mosaic.version = 11 : i64} {
  func.func @_fold_kernel(%arg0: i32, %arg1: memref<1x256xi32, #tpu.memory_space<vmem>>, %arg2: memref<2x2304xf32, #tpu.memory_space<vmem>>, %arg3: memref<2x256xf32, #tpu.memory_space<vmem>>) attributes {dimension_semantics = [#tpu.dimension_semantics<parallel>], iteration_bounds = array<i64: 1>, scalar_prefetch = 0 : i64, scratch_operands = 0 : i64, tpu.core_type = #tpu.core_type<tc>, window_params = [{pipeline_mode = #tpu.pipeline_mode<synchronous>, transform_indices = @transform_0, window_bounds = array<i64: 1, 256>}, {transform_indices = @transform_1, window_bounds = array<i64: 2, 2304>}, {transform_indices = @transform_2, window_bounds = array<i64: 2, 256>}]} {
    %0 = tpu.iota {dimensions = array<i32: 1>} : vector<2x256xi32>
    %c0 = arith.constant 0 : index
    %c0_0 = arith.constant 0 : index
    %1 = vector.load %arg1[%c0, %c0_0] : memref<1x256xi32, #tpu.memory_space<vmem>>, vector<1x256xi32>
    %2 = vector.shape_cast %1 : vector<1x256xi32> to vector<1x256xi32>
    %3 = vector.broadcast %2 : vector<1x256xi32> to vector<2x256xi32>
    %c16_i32 = arith.constant 16 : i32
    %4 = vector.broadcast %c16_i32 : i32 to vector<2x256xi32>
    %5 = arith.cmpi sge, %0, %4 : vector<2x256xi32>
    %c272_i32 = arith.constant 272 : i32
    %6 = vector.broadcast %c272_i32 : i32 to vector<2x256xi32>
    %7 = arith.cmpi slt, %0, %6 : vector<2x256xi32>
    %8 = arith.andi %5, %7 : vector<2x256xi1>
    %c-16_i32 = arith.constant -16 : i32
    %9 = vector.broadcast %c-16_i32 : i32 to vector<2x256xi32>
    %10 = arith.cmpi sge, %0, %9 : vector<2x256xi32>
    %c240_i32 = arith.constant 240 : i32
    %11 = vector.broadcast %c240_i32 : i32 to vector<2x256xi32>
    %12 = arith.cmpi slt, %0, %11 : vector<2x256xi32>
    %13 = arith.andi %10, %12 : vector<2x256xi1>
    %c-1_i32 = arith.constant -1 : i32
    %14 = vector.broadcast %c-1_i32 : i32 to vector<2x256xi32>
    %15 = arith.addi %3, %14 : vector<2x256xi32>
    %c0_i32 = arith.constant 0 : i32
    %16 = vector.broadcast %c0_i32 : i32 to vector<2x256xi32>
    %17 = arith.cmpi sge, %15, %16 : vector<2x256xi32>
    %c-1_i32_1 = arith.constant -1 : i32
    %18 = vector.broadcast %c-1_i32_1 : i32 to vector<2x256xi32>
    %19 = arith.addi %3, %18 : vector<2x256xi32>
    %c16_i32_2 = arith.constant 16 : i32
    %20 = vector.broadcast %c16_i32_2 : i32 to vector<2x256xi32>
    %21 = arith.cmpi slt, %19, %20 : vector<2x256xi32>
    %22 = arith.andi %17, %21 : vector<2x256xi1>
    %c1_i32 = arith.constant 1 : i32
    %23 = vector.broadcast %c1_i32 : i32 to vector<2x256xi32>
    %24 = arith.addi %3, %23 : vector<2x256xi32>
    %c0_i32_3 = arith.constant 0 : i32
    %25 = vector.broadcast %c0_i32_3 : i32 to vector<2x256xi32>
    %26 = arith.cmpi sge, %24, %25 : vector<2x256xi32>
    %c1_i32_4 = arith.constant 1 : i32
    %27 = vector.broadcast %c1_i32_4 : i32 to vector<2x256xi32>
    %28 = arith.addi %3, %27 : vector<2x256xi32>
    %c16_i32_5 = arith.constant 16 : i32
    %29 = vector.broadcast %c16_i32_5 : i32 to vector<2x256xi32>
    %30 = arith.cmpi slt, %28, %29 : vector<2x256xi32>
    %31 = arith.andi %26, %30 : vector<2x256xi1>
    %cst = arith.constant 0.000000e+00 : f32
    %32 = vector.broadcast %cst : f32 to vector<2x256xf32>
    %c0_6 = arith.constant 0 : index
    %c0_7 = arith.constant 0 : index
    %33 = vector.load %arg2[%c0_6, %c0_7] : memref<2x2304xf32, #tpu.memory_space<vmem>>, vector<2x256xf32>
    %c239_i32 = arith.constant 239 : i32
    %34 = tpu.dynamic_rotate %33 by %c239_i32 dim 1 : vector<2x256xf32>, i32 -> vector<2x256xf32>
    %cst_8 = arith.constant 0.000000e+00 : f32
    %35 = vector.broadcast %cst_8 : f32 to vector<2x256xf32>
    %36 = arith.select %13, %34, %35 : vector<2x256xi1>, vector<2x256xf32>
    %c0_9 = arith.constant 0 : index
    %c768 = arith.constant 768 : index
    %37 = vector.load %arg2[%c0_9, %c768] : memref<2x2304xf32, #tpu.memory_space<vmem>>, vector<2x256xf32>
    %c255_i32 = arith.constant 255 : i32
    %38 = tpu.dynamic_rotate %37 by %c255_i32 dim 1 : vector<2x256xf32>, i32 -> vector<2x256xf32>
    %39 = arith.addf %36, %38 : vector<2x256xf32>
    %c0_10 = arith.constant 0 : index
    %c1536 = arith.constant 1536 : index
    %40 = vector.load %arg2[%c0_10, %c1536] : memref<2x2304xf32, #tpu.memory_space<vmem>>, vector<2x256xf32>
    %c15_i32 = arith.constant 15 : i32
    %41 = tpu.dynamic_rotate %40 by %c15_i32 dim 1 : vector<2x256xf32>, i32 -> vector<2x256xf32>
    %cst_11 = arith.constant 0.000000e+00 : f32
    %42 = vector.broadcast %cst_11 : f32 to vector<2x256xf32>
    %43 = arith.select %8, %41, %42 : vector<2x256xi1>, vector<2x256xf32>
    %44 = arith.addf %39, %43 : vector<2x256xf32>
    %cst_12 = arith.constant 0.000000e+00 : f32
    %45 = vector.broadcast %cst_12 : f32 to vector<2x256xf32>
    %46 = arith.select %31, %44, %45 : vector<2x256xi1>, vector<2x256xf32>
    %47 = arith.addf %32, %46 : vector<2x256xf32>
    %c0_13 = arith.constant 0 : index
    %c256 = arith.constant 256 : index
    %48 = vector.load %arg2[%c0_13, %c256] : memref<2x2304xf32, #tpu.memory_space<vmem>>, vector<2x256xf32>
    %c240_i32_14 = arith.constant 240 : i32
    %49 = tpu.dynamic_rotate %48 by %c240_i32_14 dim 1 : vector<2x256xf32>, i32 -> vector<2x256xf32>
    %cst_15 = arith.constant 0.000000e+00 : f32
    %50 = vector.broadcast %cst_15 : f32 to vector<2x256xf32>
    %51 = arith.select %13, %49, %50 : vector<2x256xi1>, vector<2x256xf32>
    %c0_16 = arith.constant 0 : index
    %c1024 = arith.constant 1024 : index
    %52 = vector.load %arg2[%c0_16, %c1024] : memref<2x2304xf32, #tpu.memory_space<vmem>>, vector<2x256xf32>
    %53 = arith.addf %51, %52 : vector<2x256xf32>
    %c0_17 = arith.constant 0 : index
    %c1792 = arith.constant 1792 : index
    %54 = vector.load %arg2[%c0_17, %c1792] : memref<2x2304xf32, #tpu.memory_space<vmem>>, vector<2x256xf32>
    %c16_i32_18 = arith.constant 16 : i32
    %55 = tpu.dynamic_rotate %54 by %c16_i32_18 dim 1 : vector<2x256xf32>, i32 -> vector<2x256xf32>
    %cst_19 = arith.constant 0.000000e+00 : f32
    %56 = vector.broadcast %cst_19 : f32 to vector<2x256xf32>
    %57 = arith.select %8, %55, %56 : vector<2x256xi1>, vector<2x256xf32>
    %58 = arith.addf %53, %57 : vector<2x256xf32>
    %59 = arith.addf %47, %58 : vector<2x256xf32>
    %c0_20 = arith.constant 0 : index
    %c512 = arith.constant 512 : index
    %60 = vector.load %arg2[%c0_20, %c512] : memref<2x2304xf32, #tpu.memory_space<vmem>>, vector<2x256xf32>
    %c241_i32 = arith.constant 241 : i32
    %61 = tpu.dynamic_rotate %60 by %c241_i32 dim 1 : vector<2x256xf32>, i32 -> vector<2x256xf32>
    %cst_21 = arith.constant 0.000000e+00 : f32
    %62 = vector.broadcast %cst_21 : f32 to vector<2x256xf32>
    %63 = arith.select %13, %61, %62 : vector<2x256xi1>, vector<2x256xf32>
    %c0_22 = arith.constant 0 : index
    %c1280 = arith.constant 1280 : index
    %64 = vector.load %arg2[%c0_22, %c1280] : memref<2x2304xf32, #tpu.memory_space<vmem>>, vector<2x256xf32>
    %c1_i32_23 = arith.constant 1 : i32
    %65 = tpu.dynamic_rotate %64 by %c1_i32_23 dim 1 : vector<2x256xf32>, i32 -> vector<2x256xf32>
    %66 = arith.addf %63, %65 : vector<2x256xf32>
    %c0_24 = arith.constant 0 : index
    %c2048 = arith.constant 2048 : index
    %67 = vector.load %arg2[%c0_24, %c2048] : memref<2x2304xf32, #tpu.memory_space<vmem>>, vector<2x256xf32>
    %c17_i32 = arith.constant 17 : i32
    %68 = tpu.dynamic_rotate %67 by %c17_i32 dim 1 : vector<2x256xf32>, i32 -> vector<2x256xf32>
    %cst_25 = arith.constant 0.000000e+00 : f32
    %69 = vector.broadcast %cst_25 : f32 to vector<2x256xf32>
    %70 = arith.select %8, %68, %69 : vector<2x256xi1>, vector<2x256xf32>
    %71 = arith.addf %66, %70 : vector<2x256xf32>
    %cst_26 = arith.constant 0.000000e+00 : f32
    %72 = vector.broadcast %cst_26 : f32 to vector<2x256xf32>
    %73 = arith.select %22, %71, %72 : vector<2x256xi1>, vector<2x256xf32>
    %74 = arith.addf %59, %73 : vector<2x256xf32>
    %c0_27 = arith.constant 0 : index
    %c0_28 = arith.constant 0 : index
    %75 = vector.load %arg3[%c0_27, %c0_28] : memref<2x256xf32, #tpu.memory_space<vmem>>, vector<2x256xf32>
    tpu.vector_store %arg3[%c0_27, %c0_28], %74 {strides = array<i32>} : memref<2x256xf32, #tpu.memory_space<vmem>>, vector<2x256xf32>,
    return
  }
  func.func @transform_0(%arg0: i32) -> (i32, i32) {
    %c0_i32 = arith.constant 0 : i32
    %c0_i32_0 = arith.constant 0 : i32
    %c0_i32_1 = arith.constant 0 : i32
    return %c0_i32, %c0_i32_0 : i32, i32
  }
  func.func @transform_1(%arg0: i32) -> (i32, i32) {
    %c0_i32 = arith.constant 0 : i32
    %c0_i32_0 = arith.constant 0 : i32
    return %arg0, %c0_i32 : i32, i32
  }
  func.func @transform_2(%arg0: i32) -> (i32, i32) {
    %c0_i32 = arith.constant 0 : i32
    %c0_i32_0 = arith.constant 0 : i32
    return %arg0, %c0_i32 : i32, i32
  }
}

</mosaic_0001>

<llo_original>
// kernel: tpu_custom_call.1
$region0: #{tpu_custom_call.1}
  #allocation0 [shape = 'u32[]', space=smem, size = 0x4, offset = 0x4, fixed_abs, tag = 'smem constant byte address 0x4 - core index']
  #allocation1 [shape = 'u32[144,128]{1,0:T(1,128)}', space=vmem, size = 0x12000, scoped, tag = 'internal scratch']
  %s0 = inlined_call_operand.hbm [shape: s32[1,256], index: 0, kind: input, shape index: {}]
  %s1 = inlined_call_operand.hbm [shape: f32[2,2304], index: 1, kind: input, shape index: {}]
  %s2 = inlined_call_operand.hbm [shape: f32[2,256], index: 2, kind: output, shape index: {}]
  %s3 = sld [smem:[#allocation0]]
  $region26: #{tpu_custom_call.1} parent=0
    _
  %s5 = ssub.s32 1, %s3
  %s6 = scalar_select 0, %s5, %s3
  $region1: #{tpu_custom_call.1} parent=0
    #allocation2 [shape = 'u8[1024]{0}', space=vmem, size = 0x400, scoped, tag = 'input window, operand 0, single buffered']
    #allocation3 [shape = 's32[1]{0}', space=sflag, size = 0x4, scoped, tag = 'scoped memory for tpu_custom_call.1']
    #allocation4 [shape = 's32[1]{0}', space=sflag, size = 0x4, scoped, tag = 'scoped memory for tpu_custom_call.1']
    #allocation5 [shape = 'u8[18432]{0}', space=vmem, size = 0x4800, scoped, tag = 'input window, operand 1, single buffered']
    #allocation6 [shape = 's32[1]{0}', space=sflag, size = 0x4, scoped, tag = 'scoped memory for tpu_custom_call.1']
    #allocation7 [shape = 'u8[2048]{0}', space=vmem, size = 0x800, scoped, tag = 'output window, operand 0, single buffered']
    %7 = vsyncpa [#allocation3], 0
    %8 = vsyncpa [#allocation6], 0
    %9 = vsyncpa [#allocation4], 0
    // Predicated region
    $region2: #{tpu_custom_call.1} parent=1 // pred_check
      _
    $region3: #{tpu_custom_call.1} parent=1 // pred_check_branch
      %11 = sbr.rel (0) target = $region5
    $region4: #{tpu_custom_call.1} parent=1 // pred_region
      %s13 = ssub.s32 32, 32
      %14 = vsyncadd [#allocation3], %s13
      %s16 = sshll.u32 [#allocation2], 4
      %s17 = int_to_ptr.vmem [resolvable:$true] %s16
      %19 = dma.hbm_to_vmem [thread:$0]  %s0, 32, %s17, [#allocation3]
    $region5: #{tpu_custom_call.1} parent=1 // pred_fallthru
      _
    // Predicated region
    $region6: #{tpu_custom_call.1} parent=1 // pred_check
      _
    $region7: #{tpu_custom_call.1} parent=1 // pred_check_branch
      %21 = sbr.rel (0) target = $region9
    $region8: #{tpu_custom_call.1} parent=1 // pred_region
      %s23 = ssub.s32 576, 576
      %24 = vsyncadd [#allocation6], %s23
      %s26 = sshll.u32 [#allocation5], 4
      %s27 = int_to_ptr.vmem [resolvable:$true] %s26
      %29 = dma.hbm_to_vmem [thread:$0]  %s1, 576, %s27, [#allocation6]
    $region9: #{tpu_custom_call.1} parent=1 // pred_fallthru
      _
    // Predicated region
    $region10: #{tpu_custom_call.1} parent=1 // pred_check
      _
    $region11: #{tpu_custom_call.1} parent=1 // pred_check_branch
      %31 = sbr.rel (0) target = $region13
    $region12: #{tpu_custom_call.1} parent=1 // pred_region
      %32 = dma.done [#allocation3], 32
    $region13: #{tpu_custom_call.1} parent=1 // pred_fallthru
      _
    // Predicated region
    $region14: #{tpu_custom_call.1} parent=1 // pred_check
      _
    $region15: #{tpu_custom_call.1} parent=1 // pred_check_branch
      %34 = sbr.rel (0) target = $region17
    $region16: #{tpu_custom_call.1} parent=1 // pred_region
      %35 = dma.done [#allocation6], 576
    $region17: #{tpu_custom_call.1} parent=1 // pred_fallthru
      _
    %v36 = vlaneseq
    %v37 = vand.u32 %v36, 127
    %v38 = vadd.s32 %v37, 128
    %v39 = vld [vmem:[#allocation2] sm:$0x3]
    %v40 = vlaneseq
    %v41 = vshrl.u32 %v40, 7
    %v42 = vsub.s32 0, %v41
    %v43 = vrot.slane %v39, %v42
    %v44 = vlaneseq
    %v45 = vshrl.u32 %v44, 7
    %v46 = vsub.s32 1, %v45
    %v47 = vrot.slane %v39, %v46
    %vm48 = vcmp.ge.s32.totalorder %v37, 16
    %vm49 = vcmp.ge.s32.totalorder %v38, 16
    %vm50 = vcmp.lt.s32.totalorder %v37, 272
    %vm51 = vcmp.lt.s32.totalorder %v38, 272
    %vm52 = vmand %vm48, %vm50
    %vm53 = vmand %vm49, %vm51
    %vm54 = vcmp.ge.s32.totalorder %v37, 4294967280
    %vm55 = vcmp.ge.s32.totalorder %v38, 4294967280
    %vm56 = vcmp.lt.s32.totalorder %v37, 240
    %vm57 = vcmp.lt.s32.totalorder %v38, 240
    %vm58 = vmand %vm54, %vm56
    %vm59 = vmand %vm55, %vm57
    %v60 = vadd.s32 %v43, 4294967295
    %v61 = vadd.s32 %v47, 4294967295
    %vm62 = vcmp.ge.s32.totalorder %v60, 0
    %vm63 = vcmp.ge.s32.totalorder %v61, 0
    %vm64 = vcmp.lt.s32.totalorder %v60, 16
    %vm65 = vcmp.lt.s32.totalorder %v61, 16
    %vm66 = vmand %vm62, %vm64
    %vm67 = vmand %vm63, %vm65
    %v68 = vadd.s32 %v43, 1
    %v69 = vadd.s32 %v47, 1
    %vm70 = vcmp.ge.s32.totalorder %v68, 0
    %vm71 = vcmp.ge.s32.totalorder %v69, 0
    %vm72 = vcmp.lt.s32.totalorder %v68, 16
    %vm73 = vcmp.lt.s32.totalorder %v69, 16
    %vm74 = vmand %vm70, %vm72
    %vm75 = vmand %vm71, %vm73
    %v76 = vld [vmem:[#allocation5] sm:$0xf]
    %v79 = vunpack.c.l.s4 1983009808
    %v80 = vunpack.c.0.s8 %v79
    %v81 = vlaneseq
    %v82 = vshrl.u32 %v81, 7
    %v83 = vsub.s32 %v80, %v82
    %v84 = vrot.slane %v76, %v83
    %v85 = vcombine.high %v84, %v84
    %88 = vrot.lane.b32.xlu0 %v84, 111
    %v89 = vpop.permute.xlu0 %88
    %90 = vrot.lane.b32.xlu0 %v85, 111
    %v91 = vpop.permute.xlu0 %90
    %vm92 = vcmp.lt.s32.totalorder %v37, 111
    %v93 = vsel %vm92, %v89, %v91
    %v94 = vsel %vm92, %v91, %v89
    %v95 = vsel %vm58, %v93, 0.0
    %v96 = vsel %vm59, %v94, 0.0
    %v97 = vld [vmem:[#allocation5 + $0xc] sm:$0xf]
    %v100 = vunpack.c.l.s4 1983009808
    %v101 = vunpack.c.0.s8 %v100
    %v102 = vlaneseq
    %v103 = vshrl.u32 %v102, 7
    %v104 = vsub.s32 %v101, %v103
    %v105 = vrot.slane %v97, %v104
    %v106 = vcombine.high %v105, %v105
    %109 = vrot.lane.b32.xlu0 %v105, 127
    %v110 = vpop.permute.xlu0 %109
    %111 = vrot.lane.b32.xlu0 %v106, 127
    %v112 = vpop.permute.xlu0 %111
    %vm113 = vcmp.lt.s32.totalorder %v37, 127
    %v114 = vsel %vm113, %v110, %v112
    %v115 = vsel %vm113, %v112, %v110
    %v116 = vadd.f32 %v95, %v114
    %v117 = vadd.f32 %v96, %v115
    %v118 = vld [vmem:[#allocation5 + $0x18] sm:$0xf]
    %v121 = vunpack.c.l.s4 1983009808
    %v122 = vunpack.c.0.s8 %v121
    %v123 = vlaneseq
    %v124 = vshrl.u32 %v123, 7
    %v125 = vsub.s32 %v122, %v124
    %v126 = vrot.slane %v118, %v125
    %v127 = vcombine.high %v126, %v126
    %130 = vrot.lane.b32.xlu0 %v126, 15
    %v131 = vpop.permute.xlu0 %130
    %132 = vrot.lane.b32.xlu0 %v127, 15
    %v133 = vpop.permute.xlu0 %132
    %vm134 = vcmp.lt.s32.totalorder %v37, 15
    %v135 = vsel %vm134, %v131, %v133
    %v136 = vsel %vm134, %v133, %v131
    %v137 = vsel %vm52, %v136, 0.0
    %v138 = vsel %vm53, %v135, 0.0
    %v139 = vadd.f32 %v116, %v137
    %v140 = vadd.f32 %v117, %v138
    %v141 = vsel %vm74, %v139, 0.0
    %v142 = vsel %vm75, %v140, 0.0
    %v143 = vadd.f32 %v141, 0.0
    %v144 = vadd.f32 %v142, 0.0
    %v145 = vld [vmem:[#allocation5 + $0x4] sm:$0xf]
    %v148 = vunpack.c.l.s4 1983009808
    %v149 = vunpack.c.0.s8 %v148
    %v150 = vlaneseq
    %v151 = vshrl.u32 %v150, 7
    %v152 = vsub.s32 %v149, %v151
    %v153 = vrot.slane %v145, %v152
    %v154 = vcombine.high %v153, %v153
    %157 = vrot.lane.b32.xlu0 %v153, 112
    %v158 = vpop.permute.xlu0 %157
    %159 = vrot.lane.b32.xlu0 %v154, 112
    %v160 = vpop.permute.xlu0 %159
    %vm161 = vcmp.lt.s32.totalorder %v37, 112
    %v162 = vsel %vm161, %v158, %v160
    %v163 = vsel %vm161, %v160, %v158
    %v164 = vsel %vm58, %v162, 0.0
    %v165 = vsel %vm59, %v163, 0.0
    %v166 = vld [vmem:[#allocation5 + $0x10] sm:$0xf]
    %v169 = vunpack.c.l.s4 1983009808
    %v170 = vunpack.c.0.s8 %v169
    %v171 = vlaneseq
    %v172 = vshrl.u32 %v171, 7
    %v173 = vsub.s32 %v170, %v172
    %v174 = vrot.slane %v166, %v173
    %v175 = vcombine.high %v174, %v174
    %v178 = vadd.f32 %v164, %v174
    %v179 = vadd.f32 %v165, %v175
    %v180 = vld [vmem:[#allocation5 + $0x1c] sm:$0xf]
    %v183 = vunpack.c.l.s4 1983009808
    %v184 = vunpack.c.0.s8 %v183
    %v185 = vlaneseq
    %v186 = vshrl.u32 %v185, 7
    %v187 = vsub.s32 %v184, %v186
    %v188 = vrot.slane %v180, %v187
    %v189 = vcombine.high %v188, %v188
    %192 = vrot.lane.b32.xlu0 %v188, 16
    %v193 = vpop.permute.xlu0 %192
    %194 = vrot.lane.b32.xlu0 %v189, 16
    %v195 = vpop.permute.xlu0 %194
    %vm196 = vcmp.lt.s32.totalorder %v37, 16
    %v197 = vsel %vm196, %v193, %v195
    %v198 = vsel %vm196, %v195, %v193
    %v199 = vsel %vm52, %v198, 0.0
    %v200 = vsel %vm53, %v197, 0.0
    %v201 = vadd.f32 %v178, %v199
    %v202 = vadd.f32 %v179, %v200
    %v203 = vadd.f32 %v143, %v201
    %v204 = vadd.f32 %v144, %v202
    %v205 = vld [vmem:[#allocation5 + $0x8] sm:$0xf]
    %v208 = vunpack.c.l.s4 1983009808
    %v209 = vunpack.c.0.s8 %v208
    %v210 = vlaneseq
    %v211 = vshrl.u32 %v210, 7
    %v212 = vsub.s32 %v209, %v211
    %v213 = vrot.slane %v205, %v212
    %v214 = vcombine.high %v213, %v213
    %217 = vrot.lane.b32.xlu0 %v213, 113
    %v218 = vpop.permute.xlu0 %217
    %219 = vrot.lane.b32.xlu0 %v214, 113
    %v220 = vpop.permute.xlu0 %219
    %vm221 = vcmp.lt.s32.totalorder %v37, 113
    %v222 = vsel %vm221, %v218, %v220
    %v223 = vsel %vm221, %v220, %v218
    %v224 = vsel %vm58, %v222, 0.0
    %v225 = vsel %vm59, %v223, 0.0
    %v226 = vld [vmem:[#allocation5 + $0x14] sm:$0xf]
    %v229 = vunpack.c.l.s4 1983009808
    %v230 = vunpack.c.0.s8 %v229
    %v231 = vlaneseq
    %v232 = vshrl.u32 %v231, 7
    %v233 = vsub.s32 %v230, %v232
    %v234 = vrot.slane %v226, %v233
    %v235 = vcombine.high %v234, %v234
    %238 = vrot.lane.b32.xlu0 %v234, 1
    %v239 = vpop.permute.xlu0 %238
    %240 = vrot.lane.b32.xlu0 %v235, 1
    %v241 = vpop.permute.xlu0 %240
    %vm242 = vcmp.lt.s32.totalorder %v37, 1
    %v243 = vsel %vm242, %v239, %v241
    %v244 = vsel %vm242, %v241, %v239
    %v245 = vadd.f32 %v224, %v244
    %v246 = vadd.f32 %v225, %v243
    %v247 = vld [vmem:[#allocation5 + $0x20] sm:$0xf]
    %v250 = vunpack.c.l.s4 1983009808
    %v251 = vunpack.c.0.s8 %v250
    %v252 = vlaneseq
    %v253 = vshrl.u32 %v252, 7
    %v254 = vsub.s32 %v251, %v253
    %v255 = vrot.slane %v247, %v254
    %v256 = vcombine.high %v255, %v255
    %259 = vrot.lane.b32.xlu0 %v255, 17
    %v260 = vpop.permute.xlu0 %259
    %261 = vrot.lane.b32.xlu0 %v256, 17
    %v262 = vpop.permute.xlu0 %261
    %vm263 = vcmp.lt.s32.totalorder %v37, 17
    %v264 = vsel %vm263, %v260, %v262
    %v265 = vsel %vm263, %v262, %v260
    %v266 = vsel %vm52, %v265, 0.0
    %v267 = vsel %vm53, %v264, 0.0
    %v268 = vadd.f32 %v245, %v266
    %v269 = vadd.f32 %v246, %v267
    %v270 = vsel %vm66, %v268, 0.0
    %v271 = vsel %vm67, %v269, 0.0
    %v272 = vadd.f32 %v203, %v270
    %v273 = vadd.f32 %v204, %v271
    %v276 = vcombine.low %v272, %v273
    %v278 = vunpack.c.l.s4 1983009808
    %v279 = vunpack.c.0.s8 %v278
    %v280 = vlaneseq
    %v281 = vshrl.u32 %v280, 7
    %v282 = vsub.s32 %v279, %v281
    %v283 = vrot.slane %v276, %v282
    %285 = vst [vmem:[#allocation7] sm:$0xf] %v283
    // Predicated region
    $region18: #{tpu_custom_call.1} parent=1 // pred_check
      _
    $region19: #{tpu_custom_call.1} parent=1 // pred_check_branch
      %287 = sbr.rel (0) target = $region21
    $region20: #{tpu_custom_call.1} parent=1 // pred_region
      %s289 = ssub.s32 64, 64
      %290 = vsyncadd [#allocation4], %s289
      %s292 = sshll.u32 [#allocation7], 4
      %s293 = int_to_ptr.vmem [resolvable:$true] %s292
      %295 = dma.vmem_to_hbm [thread:$0]  %s293, 64, %s2, [#allocation4]
    $region21: #{tpu_custom_call.1} parent=1 // pred_fallthru
      _
    // Predicated region
    $region22: #{tpu_custom_call.1} parent=1 // pred_check
      _
    $region23: #{tpu_custom_call.1} parent=1 // pred_check_branch
      %297 = sbr.rel (0) target = $region25
    $region24: #{tpu_custom_call.1} parent=1 // pred_region
      %298 = dma.done [#allocation4], 64
    $region25: #{tpu_custom_call.1} parent=1 // pred_fallthru
      _
    %299 = vsyncpa [#allocation3], 1
    %300 = vsyncpa [#allocation6], 1
    %301 = vsyncpa [#allocation4], 1

</llo_original>
